<compile_context>
chip_gen: v7x
topology: tpu7x:2x2x1
jax: 0.10.0
libtpu: 0.0.40
codegen_flags: <defaults>
</compile_context>

<pallas_src>
import jax
import jax.numpy as jnp
from jax.experimental import pallas as pl
from jax.experimental.pallas import tpu as pltpu

_TILE_P = 8            # polygons rasterized per grid step (== vreg sublane count)
_PNP_LANE_TILE = 512   # spatial lanes per pnp grid step (bounds vreg pressure)
_FUSE_LANE_TILE = 4096 # spatial lanes per fuse grid step (streaming, few live vregs)


def _pick_lane_tile(hw, max_tile):
    """Largest multiple-of-128 divisor of hw that is <= max_tile (or hw itself)."""
    if hw <= max_tile or hw % 128 != 0:
        return hw
    best = 128
    t = 128
    while t <= max_tile:
        if hw % t == 0:
            best = t
        t += 128
    return best


def _pick_row_tile(rows, lane, itemsize, budget=2 * 1024 * 1024):
    """Largest multiple-of-8 divisor of rows whose (rows_tile, lane) block fits budget."""
    if rows % 8 != 0:
        return rows            # full-dim block is always legal
    best = 8
    t = 8
    while t <= rows:
        if rows % t == 0 and t * lane * itemsize <= budget:
            best = t
        t += 8
    return best


def _pnp_kernel(px_ref, py_ref, vy_ref, slope_ref, icpt_ref, mask_ref, pmax_ref):
    """Rasterize TILE_P polygons (even-odd rule) over one flattened-spatial lane tile."""
    tile_p, lane = mask_ref.shape
    n = vy_ref.shape[1]

    # Hoist the sublane broadcasts of the pixel coordinates out of the edge loop.
    py = jnp.broadcast_to(py_ref[...], (tile_p, lane))
    px = jnp.broadcast_to(px_ref[...], (tile_p, lane))

    # Wraparound prologue: "previous vertex" of edge 0 is vertex n-1.
    gt_prev = vy_ref[:, n - 1:n] > py                 # (tile_p, lane)
    parity = None
    for i in range(n):                                # static loop -> fully unrolled
        gt_i = vy_ref[:, i:i + 1] > py                # (tile_p, lane)
        x_int = slope_ref[:, i:i + 1] * py + icpt_ref[:, i:i + 1]
        cross = jnp.logical_and(gt_i != gt_prev, px < x_int)
        parity = cross if parity is None else jnp.logical_xor(parity, cross)
        gt_prev = gt_i

    maskf = parity.astype(jnp.float32)
    mask_ref[...] = maskf
    # partial max over this tile's TILE_P polygons (consumed by the fuse step)
    pmax_ref[...] = jnp.max(maskf, axis=0, keepdims=True)[None]


def _fuse_kernel(scale_ref, feat_ref, out_ref):
    """out = relu(feat * (max_mask + 1)) over one (row-tile, lane-tile) block."""
    fused = feat_ref[...] * scale_ref[...]            # (tile_r, lane) * (1, lane)
    out_ref[...] = jnp.maximum(fused, 0.0).astype(out_ref.dtype)


def pnp_contour_feature(contour, cnn_feature, ct_num=None):
    """Reproduces PnP_contour_feature.forward with ct_num=None (forward_test path)."""
    # TODO(synk): forward_train's per-batch scatter of masks driven by python-int
    # ct_num values is host-side data-dependent control flow; not implemented here.
    bs, c, h, w = cnn_feature.shape
    P = contour.shape[0]
    hw = h * w

    if P == 0:  # matches the reference's empty-contour early return
        return jnp.zeros((0, 1, h, w), jnp.float32), cnn_feature

    num_point = contour.shape[1]

    # clip_to_image: clamp contour coordinates into the feature-map extent.
    cx = jnp.clip(contour[..., 0].astype(jnp.float32), 0.0, float(w - 1))  # (P, n)
    cy = jnp.clip(contour[..., 1].astype(jnp.float32), 0.0, float(h - 1))

    # Pad the polygon count to a multiple of TILE_P with degenerate (all-zero)
    # polygons; they rasterize to all-zero masks and do not perturb the max.
    p_pad = -(-P // _TILE_P) * _TILE_P
    if p_pad != P:
        cx = jnp.pad(cx, ((0, p_pad - P), (0, 0)))
        cy = jnp.pad(cy, ((0, p_pad - P), (0, 0)))
    num_p_tiles = p_pad // _TILE_P

    # Per-edge constants (edge i connects vertex i and vertex i-1, wrapping around),
    # precomputed once on tiny (p_pad, num_point) arrays so the kernel never divides:
    #   x_int = slope*py + icpt   with   slope = (xj-xi)/(yj-yi), icpt = xi - slope*yi
    xj = jnp.roll(cx, 1, axis=1)
    yj = jnp.roll(cy, 1, axis=1)
    denom = yj - cy
    safe = jnp.where(denom == 0.0, 1.0, denom)        # horizontal-edge guard
    slope = (xj - cx) / safe
    icpt = cx - slope * cy

    # Flattened pixel-center coordinates, computed once outside the kernel.
    # TODO(synk): the reference `pnp` CUDA op's exact sample-point convention is
    # unknown; integer pixel coordinates with strict inequalities are used here.
    idx = jnp.arange(hw, dtype=jnp.int32)
    py_row = (idx // w).astype(jnp.float32).reshape(1, hw)
    px_row = (idx % w).astype(jnp.float32).reshape(1, hw)

    lane_p = _pick_lane_tile(hw, _PNP_LANE_TILE)
    num_hw_tiles = hw // lane_p

    mask_flat, pmax = pl.pallas_call(
        _pnp_kernel,
        out_shape=(
            jax.ShapeDtypeStruct((p_pad, hw), jnp.float32),
            jax.ShapeDtypeStruct((num_p_tiles, 1, hw), jnp.float32),
        ),
        grid=(num_p_tiles, num_hw_tiles),
        in_specs=[
            pl.BlockSpec((1, lane_p), lambda p, s: (0, s)),               # px
            pl.BlockSpec((1, lane_p), lambda p, s: (0, s)),               # py
            pl.BlockSpec((_TILE_P, num_point), lambda p, s: (p, 0)),      # vertex y
            pl.BlockSpec((_TILE_P, num_point), lambda p, s: (p, 0)),      # edge slope
            pl.BlockSpec((_TILE_P, num_point), lambda p, s: (p, 0)),      # edge icpt
        ],
        out_specs=(
            pl.BlockSpec((_TILE_P, lane_p), lambda p, s: (p, s)),
            pl.BlockSpec((1, 1, lane_p), lambda p, s: (p, 0, s)),
        ),
        compiler_params=pltpu.CompilerParams(
            dimension_semantics=("parallel", "parallel")),
    )(px_row, py_row, cy, slope, icpt)

    # Final reduce over the few polygon tiles + the "+1" of the fuse arithmetic,
    # done once on a tiny (num_p_tiles, hw) array in plain JAX.
    scale_row = (jnp.max(pmax[:, 0, :], axis=0) + 1.0).reshape(1, hw)

    rows = bs * c
    feat_rows = cnn_feature.reshape(rows, hw)
    itemsize = jnp.dtype(cnn_feature.dtype).itemsize
    lane_f = _pick_lane_tile(hw, _FUSE_LANE_TILE)
    tile_r = _pick_row_tile(rows, lane_f, itemsize)

    fused_rows = pl.pallas_call(
        _fuse_kernel,
        out_shape=jax.ShapeDtypeStruct((rows, hw), cnn_feature.dtype),
        grid=(rows // tile_r, hw // lane_f),
        in_specs=[
            pl.BlockSpec((1, lane_f), lambda r, s: (0, s)),               # scale row
            pl.BlockSpec((tile_r, lane_f), lambda r, s: (r, s)),          # features
        ],
        out_specs=pl.BlockSpec((tile_r, lane_f), lambda r, s: (r, s)),
        compiler_params=pltpu.CompilerParams(
            dimension_semantics=("parallel", "parallel")),
    )(scale_row, feat_rows)

    fused_feat = fused_rows.reshape(bs, c, h, w)
    mask_batch = mask_flat[:P].reshape(P, h, w)[None]  # == torch.unsqueeze(mask, 0)
    return mask_batch, fused_feat


if __name__ == "__main__":
    key = jax.random.PRNGKey(0)
    bs, c, h, w = 2, 4, 16, 16
    P, num_point = 3, 8

    k1, k2, k3 = jax.random.split(key, 3)
    # deterministic simple (star-shaped) polygons: center + radius*(cos, sin)
    centers = jax.random.uniform(k1, (P, 1, 2), minval=4.0, maxval=12.0)
    angles = jnp.sort(
        jax.random.uniform(k2, (P, num_point), minval=0.0, maxval=2.0 * jnp.pi),
        axis=-1,
    )
    radii = jax.random.uniform(k3, (P, num_point), minval=2.0, maxval=6.0)
    contour = centers + jnp.stack(
        [radii * jnp.cos(angles), radii * jnp.sin(angles)], axis=-1
    )  # (P, num_point, 2), (x, y)

    cnn_feature = jax.random.normal(
        jax.random.PRNGKey(1), (bs, c, h, w), dtype=jnp.float32
    )

    mask_batch, feat = pnp_contour_feature(contour, cnn_feature)
    jax.block_until_ready((mask_batch, feat))

    assert mask_batch.shape == (1, P, h, w)
    assert feat.shape == (bs, c, h, w)
    assert bool(jnp.all((mask_batch == 0.0) | (mask_batch == 1.0)))  # binary masks
    assert bool(jnp.all(feat >= 0.0))                                # ReLU output
    # end-to-end consistency with the reference arithmetic:
    # relu(max(mask_batch, dim=1, keepdim=True) * feat + feat)
    max_mask = jnp.max(mask_batch, axis=1, keepdims=True)
    expected = jnp.maximum(max_mask * cnn_feature + cnn_feature, 0.0)
    assert bool(jnp.allclose(feat, expected, atol=1e-6))
    print("KERNEL_OK")
</pallas_src>

<mosaic_0001>
module attributes {stable_mosaic.version = 11 : i64} {
  func.func @_pnp_kernel(%arg0: i32, %arg1: i32, %arg2: memref<1x256xf32, #tpu.memory_space<vmem>>, %arg3: memref<1x256xf32, #tpu.memory_space<vmem>>, %arg4: memref<8x8xf32, #tpu.memory_space<vmem>>, %arg5: memref<8x8xf32, #tpu.memory_space<vmem>>, %arg6: memref<8x8xf32, #tpu.memory_space<vmem>>, %arg7: memref<8x256xf32, #tpu.memory_space<vmem>>, %arg8: memref<1x1x256xf32, #tpu.memory_space<vmem>>) attributes {dimension_semantics = [#tpu.dimension_semantics<parallel>, #tpu.dimension_semantics<parallel>], iteration_bounds = array<i64: 1, 1>, scalar_prefetch = 0 : i64, scratch_operands = 0 : i64, tpu.core_type = #tpu.core_type<tc>, window_params = [{transform_indices = @transform_0, window_bounds = array<i64: 1, 256>}, {transform_indices = @transform_1, window_bounds = array<i64: 1, 256>}, {transform_indices = @transform_2, window_bounds = array<i64: 8, 8>}, {transform_indices = @transform_3, window_bounds = array<i64: 8, 8>}, {transform_indices = @transform_4, window_bounds = array<i64: 8, 8>}, {transform_indices = @transform_5, window_bounds = array<i64: 8, 256>}, {transform_indices = @transform_6, window_bounds = array<i64: 1, 1, 256>}]} {
    %c0 = arith.constant 0 : index
    %c0_0 = arith.constant 0 : index
    %0 = vector.load %arg3[%c0, %c0_0] : memref<1x256xf32, #tpu.memory_space<vmem>>, vector<1x256xf32>
    %1 = vector.shape_cast %0 : vector<1x256xf32> to vector<1x256xf32>
    %2 = vector.broadcast %1 : vector<1x256xf32> to vector<8x256xf32>
    %c0_1 = arith.constant 0 : index
    %c0_2 = arith.constant 0 : index
    %3 = vector.load %arg2[%c0_1, %c0_2] : memref<1x256xf32, #tpu.memory_space<vmem>>, vector<1x256xf32>
    %4 = vector.shape_cast %3 : vector<1x256xf32> to vector<1x256xf32>
    %5 = vector.broadcast %4 : vector<1x256xf32> to vector<8x256xf32>
    %c0_3 = arith.constant 0 : index
    %c7 = arith.constant 7 : index
    %6 = vector.load %arg4[%c0_3, %c7] : memref<8x8xf32, #tpu.memory_space<vmem>>, vector<8x1xf32>
    %7 = vector.broadcast %6 : vector<8x1xf32> to vector<8x256xf32>
    %8 = arith.cmpf ogt, %7, %2 : vector<8x256xf32>
    %c0_4 = arith.constant 0 : index
    %c0_5 = arith.constant 0 : index
    %9 = vector.load %arg4[%c0_4, %c0_5] : memref<8x8xf32, #tpu.memory_space<vmem>>, vector<8x1xf32>
    %10 = vector.broadcast %9 : vector<8x1xf32> to vector<8x256xf32>
    %11 = arith.cmpf ogt, %10, %2 : vector<8x256xf32>
    %c0_6 = arith.constant 0 : index
    %c0_7 = arith.constant 0 : index
    %12 = vector.load %arg5[%c0_6, %c0_7] : memref<8x8xf32, #tpu.memory_space<vmem>>, vector<8x1xf32>
    %13 = vector.broadcast %12 : vector<8x1xf32> to vector<8x256xf32>
    %14 = arith.mulf %13, %2 : vector<8x256xf32>
    %c0_8 = arith.constant 0 : index
    %c0_9 = arith.constant 0 : index
    %15 = vector.load %arg6[%c0_8, %c0_9] : memref<8x8xf32, #tpu.memory_space<vmem>>, vector<8x1xf32>
    %16 = vector.broadcast %15 : vector<8x1xf32> to vector<8x256xf32>
    %17 = arith.addf %14, %16 : vector<8x256xf32>
    %18 = arith.xori %11, %8 : vector<8x256xi1>
    %19 = arith.cmpf olt, %5, %17 : vector<8x256xf32>
    %20 = arith.andi %18, %19 : vector<8x256xi1>
    %c0_10 = arith.constant 0 : index
    %c1 = arith.constant 1 : index
    %21 = vector.load %arg4[%c0_10, %c1] : memref<8x8xf32, #tpu.memory_space<vmem>>, vector<8x1xf32>
    %22 = vector.broadcast %21 : vector<8x1xf32> to vector<8x256xf32>
    %23 = arith.cmpf ogt, %22, %2 : vector<8x256xf32>
    %c0_11 = arith.constant 0 : index
    %c1_12 = arith.constant 1 : index
    %24 = vector.load %arg5[%c0_11, %c1_12] : memref<8x8xf32, #tpu.memory_space<vmem>>, vector<8x1xf32>
    %25 = vector.broadcast %24 : vector<8x1xf32> to vector<8x256xf32>
    %26 = arith.mulf %25, %2 : vector<8x256xf32>
    %c0_13 = arith.constant 0 : index
    %c1_14 = arith.constant 1 : index
    %27 = vector.load %arg6[%c0_13, %c1_14] : memref<8x8xf32, #tpu.memory_space<vmem>>, vector<8x1xf32>
    %28 = vector.broadcast %27 : vector<8x1xf32> to vector<8x256xf32>
    %29 = arith.addf %26, %28 : vector<8x256xf32>
    %30 = arith.xori %23, %11 : vector<8x256xi1>
    %31 = arith.cmpf olt, %5, %29 : vector<8x256xf32>
    %32 = arith.andi %30, %31 : vector<8x256xi1>
    %33 = arith.xori %20, %32 : vector<8x256xi1>
    %c0_15 = arith.constant 0 : index
    %c2 = arith.constant 2 : index
    %34 = vector.load %arg4[%c0_15, %c2] : memref<8x8xf32, #tpu.memory_space<vmem>>, vector<8x1xf32>
    %35 = vector.broadcast %34 : vector<8x1xf32> to vector<8x256xf32>
    %36 = arith.cmpf ogt, %35, %2 : vector<8x256xf32>
    %c0_16 = arith.constant 0 : index
    %c2_17 = arith.constant 2 : index
    %37 = vector.load %arg5[%c0_16, %c2_17] : memref<8x8xf32, #tpu.memory_space<vmem>>, vector<8x1xf32>
    %38 = vector.broadcast %37 : vector<8x1xf32> to vector<8x256xf32>
    %39 = arith.mulf %38, %2 : vector<8x256xf32>
    %c0_18 = arith.constant 0 : index
    %c2_19 = arith.constant 2 : index
    %40 = vector.load %arg6[%c0_18, %c2_19] : memref<8x8xf32, #tpu.memory_space<vmem>>, vector<8x1xf32>
    %41 = vector.broadcast %40 : vector<8x1xf32> to vector<8x256xf32>
    %42 = arith.addf %39, %41 : vector<8x256xf32>
    %43 = arith.xori %36, %23 : vector<8x256xi1>
    %44 = arith.cmpf olt, %5, %42 : vector<8x256xf32>
    %45 = arith.andi %43, %44 : vector<8x256xi1>
    %46 = arith.xori %33, %45 : vector<8x256xi1>
    %c0_20 = arith.constant 0 : index
    %c3 = arith.constant 3 : index
    %47 = vector.load %arg4[%c0_20, %c3] : memref<8x8xf32, #tpu.memory_space<vmem>>, vector<8x1xf32>
    %48 = vector.broadcast %47 : vector<8x1xf32> to vector<8x256xf32>
    %49 = arith.cmpf ogt, %48, %2 : vector<8x256xf32>
    %c0_21 = arith.constant 0 : index
    %c3_22 = arith.constant 3 : index
    %50 = vector.load %arg5[%c0_21, %c3_22] : memref<8x8xf32, #tpu.memory_space<vmem>>, vector<8x1xf32>
    %51 = vector.broadcast %50 : vector<8x1xf32> to vector<8x256xf32>
    %52 = arith.mulf %51, %2 : vector<8x256xf32>
    %c0_23 = arith.constant 0 : index
    %c3_24 = arith.constant 3 : index
    %53 = vector.load %arg6[%c0_23, %c3_24] : memref<8x8xf32, #tpu.memory_space<vmem>>, vector<8x1xf32>
    %54 = vector.broadcast %53 : vector<8x1xf32> to vector<8x256xf32>
    %55 = arith.addf %52, %54 : vector<8x256xf32>
    %56 = arith.xori %49, %36 : vector<8x256xi1>
    %57 = arith.cmpf olt, %5, %55 : vector<8x256xf32>
    %58 = arith.andi %56, %57 : vector<8x256xi1>
    %59 = arith.xori %46, %58 : vector<8x256xi1>
    %c0_25 = arith.constant 0 : index
    %c4 = arith.constant 4 : index
    %60 = vector.load %arg4[%c0_25, %c4] : memref<8x8xf32, #tpu.memory_space<vmem>>, vector<8x1xf32>
    %61 = vector.broadcast %60 : vector<8x1xf32> to vector<8x256xf32>
    %62 = arith.cmpf ogt, %61, %2 : vector<8x256xf32>
    %c0_26 = arith.constant 0 : index
    %c4_27 = arith.constant 4 : index
    %63 = vector.load %arg5[%c0_26, %c4_27] : memref<8x8xf32, #tpu.memory_space<vmem>>, vector<8x1xf32>
    %64 = vector.broadcast %63 : vector<8x1xf32> to vector<8x256xf32>
    %65 = arith.mulf %64, %2 : vector<8x256xf32>
    %c0_28 = arith.constant 0 : index
    %c4_29 = arith.constant 4 : index
    %66 = vector.load %arg6[%c0_28, %c4_29] : memref<8x8xf32, #tpu.memory_space<vmem>>, vector<8x1xf32>
    %67 = vector.broadcast %66 : vector<8x1xf32> to vector<8x256xf32>
    %68 = arith.addf %65, %67 : vector<8x256xf32>
    %69 = arith.xori %62, %49 : vector<8x256xi1>
    %70 = arith.cmpf olt, %5, %68 : vector<8x256xf32>
    %71 = arith.andi %69, %70 : vector<8x256xi1>
    %72 = arith.xori %59, %71 : vector<8x256xi1>
    %c0_30 = arith.constant 0 : index
    %c5 = arith.constant 5 : index
    %73 = vector.load %arg4[%c0_30, %c5] : memref<8x8xf32, #tpu.memory_space<vmem>>, vector<8x1xf32>
    %74 = vector.broadcast %73 : vector<8x1xf32> to vector<8x256xf32>
    %75 = arith.cmpf ogt, %74, %2 : vector<8x256xf32>
    %c0_31 = arith.constant 0 : index
    %c5_32 = arith.constant 5 : index
    %76 = vector.load %arg5[%c0_31, %c5_32] : memref<8x8xf32, #tpu.memory_space<vmem>>, vector<8x1xf32>
    %77 = vector.broadcast %76 : vector<8x1xf32> to vector<8x256xf32>
    %78 = arith.mulf %77, %2 : vector<8x256xf32>
    %c0_33 = arith.constant 0 : index
    %c5_34 = arith.constant 5 : index
    %79 = vector.load %arg6[%c0_33, %c5_34] : memref<8x8xf32, #tpu.memory_space<vmem>>, vector<8x1xf32>
    %80 = vector.broadcast %79 : vector<8x1xf32> to vector<8x256xf32>
    %81 = arith.addf %78, %80 : vector<8x256xf32>
    %82 = arith.xori %75, %62 : vector<8x256xi1>
    %83 = arith.cmpf olt, %5, %81 : vector<8x256xf32>
    %84 = arith.andi %82, %83 : vector<8x256xi1>
    %85 = arith.xori %72, %84 : vector<8x256xi1>
    %c0_35 = arith.constant 0 : index
    %c6 = arith.constant 6 : index
    %86 = vector.load %arg4[%c0_35, %c6] : memref<8x8xf32, #tpu.memory_space<vmem>>, vector<8x1xf32>
    %87 = vector.broadcast %86 : vector<8x1xf32> to vector<8x256xf32>
    %88 = arith.cmpf ogt, %87, %2 : vector<8x256xf32>
    %c0_36 = arith.constant 0 : index
    %c6_37 = arith.constant 6 : index
    %89 = vector.load %arg5[%c0_36, %c6_37] : memref<8x8xf32, #tpu.memory_space<vmem>>, vector<8x1xf32>
    %90 = vector.broadcast %89 : vector<8x1xf32> to vector<8x256xf32>
    %91 = arith.mulf %90, %2 : vector<8x256xf32>
    %c0_38 = arith.constant 0 : index
    %c6_39 = arith.constant 6 : index
    %92 = vector.load %arg6[%c0_38, %c6_39] : memref<8x8xf32, #tpu.memory_space<vmem>>, vector<8x1xf32>
    %93 = vector.broadcast %92 : vector<8x1xf32> to vector<8x256xf32>
    %94 = arith.addf %91, %93 : vector<8x256xf32>
    %95 = arith.xori %88, %75 : vector<8x256xi1>
    %96 = arith.cmpf olt, %5, %94 : vector<8x256xf32>
    %97 = arith.andi %95, %96 : vector<8x256xi1>
    %98 = arith.xori %85, %97 : vector<8x256xi1>
    %c0_40 = arith.constant 0 : index
    %c7_41 = arith.constant 7 : index
    %99 = vector.load %arg4[%c0_40, %c7_41] : memref<8x8xf32, #tpu.memory_space<vmem>>, vector<8x1xf32>
    %100 = vector.broadcast %99 : vector<8x1xf32> to vector<8x256xf32>
    %101 = arith.cmpf ogt, %100, %2 : vector<8x256xf32>
    %c0_42 = arith.constant 0 : index
    %c7_43 = arith.constant 7 : index
    %102 = vector.load %arg5[%c0_42, %c7_43] : memref<8x8xf32, #tpu.memory_space<vmem>>, vector<8x1xf32>
    %103 = vector.broadcast %102 : vector<8x1xf32> to vector<8x256xf32>
    %104 = arith.mulf %103, %2 : vector<8x256xf32>
    %c0_44 = arith.constant 0 : index
    %c7_45 = arith.constant 7 : index
    %105 = vector.load %arg6[%c0_44, %c7_45] : memref<8x8xf32, #tpu.memory_space<vmem>>, vector<8x1xf32>
    %106 = vector.broadcast %105 : vector<8x1xf32> to vector<8x256xf32>
    %107 = arith.addf %104, %106 : vector<8x256xf32>
    %108 = arith.xori %101, %88 : vector<8x256xi1>
    %109 = arith.cmpf olt, %5, %107 : vector<8x256xf32>
    %110 = arith.andi %108, %109 : vector<8x256xi1>
    %111 = arith.xori %98, %110 : vector<8x256xi1>
    %112 = arith.extui %111 : vector<8x256xi1> to vector<8x256xi32>
    %113 = arith.sitofp %112 : vector<8x256xi32> to vector<8x256xf32>
    %c0_46 = arith.constant 0 : index
    %c0_47 = arith.constant 0 : index
    %114 = vector.load %arg7[%c0_46, %c0_47] : memref<8x256xf32, #tpu.memory_space<vmem>>, vector<8x256xf32>
    tpu.vector_store %arg7[%c0_46, %c0_47], %113 {strides = array<i32>} : memref<8x256xf32, #tpu.memory_space<vmem>>, vector<8x256xf32>,
    %cst = arith.constant dense<0xFF800000> : vector<256xf32>
    %115 = vector.multi_reduction <maximumf>, %113, %cst [0] : vector<8x256xf32> to vector<256xf32>
    %116 = vector.shape_cast %115 : vector<256xf32> to vector<1x256xf32>
    %117 = vector.shape_cast %116 : vector<1x256xf32> to vector<1x1x256xf32>
    %c0_48 = arith.constant 0 : index
    %c0_49 = arith.constant 0 : index
    %c0_50 = arith.constant 0 : index
    %118 = vector.load %arg8[%c0_48, %c0_49, %c0_50] : memref<1x1x256xf32, #tpu.memory_space<vmem>>, vector<1x1x256xf32>
    tpu.vector_store %arg8[%c0_48, %c0_49, %c0_50], %117 {strides = array<i32>} : memref<1x1x256xf32, #tpu.memory_space<vmem>>, vector<1x1x256xf32>,
    return
  }
  func.func @transform_0(%arg0: i32, %arg1: i32) -> (i32, i32) {
    %c0_i32 = arith.constant 0 : i32
    %c0_i32_0 = arith.constant 0 : i32
    return %c0_i32, %arg1 : i32, i32
  }
  func.func @transform_1(%arg0: i32, %arg1: i32) -> (i32, i32) {
    %c0_i32 = arith.constant 0 : i32
    %c0_i32_0 = arith.constant 0 : i32
    return %c0_i32, %arg1 : i32, i32
  }
  func.func @transform_2(%arg0: i32, %arg1: i32) -> (i32, i32) {
    %c0_i32 = arith.constant 0 : i32
    %c0_i32_0 = arith.constant 0 : i32
    return %arg0, %c0_i32 : i32, i32
  }
  func.func @transform_3(%arg0: i32, %arg1: i32) -> (i32, i32) {
    %c0_i32 = arith.constant 0 : i32
    %c0_i32_0 = arith.constant 0 : i32
    return %arg0, %c0_i32 : i32, i32
  }
  func.func @transform_4(%arg0: i32, %arg1: i32) -> (i32, i32) {
    %c0_i32 = arith.constant 0 : i32
    %c0_i32_0 = arith.constant 0 : i32
    return %arg0, %c0_i32 : i32, i32
  }
  func.func @transform_5(%arg0: i32, %arg1: i32) -> (i32, i32) {
    %c0_i32 = arith.constant 0 : i32
    return %arg0, %arg1 : i32, i32
  }
  func.func @transform_6(%arg0: i32, %arg1: i32) -> (i32, i32, i32) {
    %c0_i32 = arith.constant 0 : i32
    %c0_i32_0 = arith.constant 0 : i32
    return %arg0, %c0_i32, %arg1 : i32, i32, i32
  }
}

</mosaic_0001>

<llo_original>
// kernel: tpu_custom_call.1
$region0: #{tpu_custom_call.1}
  #allocation0 [shape = 'u32[]', space=smem, size = 0x4, offset = 0x4, fixed_abs, tag = 'smem constant byte address 0x4 - core index']
  #allocation1 [shape = 'u32[144,128]{1,0:T(1,128)}', space=vmem, size = 0x12000, scoped, tag = 'internal scratch']
  %s0 = inlined_call_operand.hbm [shape: f32[1,256], index: 0, kind: input, shape index: {}]
  %s1 = inlined_call_operand.vmem [shape: f32[1,256], index: 1, kind: input, shape index: {}]
  %s2 = inlined_call_operand.hbm [shape: f32[8,8], index: 2, kind: input, shape index: {}]
  %s3 = inlined_call_operand.vmem [shape: f32[8,8], index: 3, kind: input, shape index: {}]
  %s4 = inlined_call_operand.hbm [shape: f32[8,8], index: 4, kind: input, shape index: {}]
  %s5 = inlined_call_operand.hbm [shape: f32[8,256], index: 5, kind: output, shape index: {0}]
  %s6 = inlined_call_operand.hbm [shape: f32[1,1,256], index: 6, kind: output, shape index: {1}]
  %7 = xla_tuple %s5, %s6
  %s8 = sld [smem:[#allocation0]]
  $region50: #{tpu_custom_call.1} parent=0
    _
  %s10 = ssub.s32 1, %s8
  %s11 = scalar_select 0, %s10, %s8
  $region1: #{tpu_custom_call.1} parent=0
    #allocation2 [shape = 'u8[1024]{0}', space=vmem, size = 0x400, scoped, tag = 'input window, operand 0, single buffered']
    #allocation3 [shape = 's32[1]{0}', space=sflag, size = 0x4, scoped, tag = 'scoped memory for tpu_custom_call.1']
    #allocation4 [shape = 's32[1]{0}', space=sflag, size = 0x4, scoped, tag = 'scoped memory for tpu_custom_call.1']
    #allocation5 [shape = 'u8[4096]{0}', space=vmem, size = 0x1000, scoped, tag = 'input window, operand 2, single buffered']
    #allocation6 [shape = 's32[1]{0}', space=sflag, size = 0x4, scoped, tag = 'scoped memory for tpu_custom_call.1']
    #allocation7 [shape = 'u8[4096]{0}', space=vmem, size = 0x1000, scoped, tag = 'input window, operand 4, single buffered']
    #allocation8 [shape = 'u8[8192]{0}', space=vmem, size = 0x2000, scoped, tag = 'output window, operand 0, single buffered']
    #allocation9 [shape = 'u8[1024]{0}', space=vmem, size = 0x400, scoped, tag = 'output window, operand 1, single buffered']
    #allocation10 [shape = 's32[1]{0}', space=sflag, size = 0x4, scoped, tag = 'scoped memory for tpu_custom_call.1']
    %12 = vsyncpa [#allocation3], 0
    %13 = vsyncpa [#allocation6], 0
    %14 = vsyncpa [#allocation4], 0
    %15 = vsyncpa [#allocation10], 0
    // Predicated region
    $region2: #{tpu_custom_call.1} parent=1 // pred_check
      _
    $region3: #{tpu_custom_call.1} parent=1 // pred_check_branch
      %17 = sbr.rel (0) target = $region5
    $region4: #{tpu_custom_call.1} parent=1 // pred_region
      %s19 = ssub.s32 32, 32
      %20 = vsyncadd [#allocation3], %s19
      %s22 = sshll.u32 [#allocation2], 4
      %s23 = int_to_ptr.vmem [resolvable:$true] %s22
      %25 = dma.hbm_to_vmem [thread:$0]  %s0, 32, %s23, [#allocation3]
    $region5: #{tpu_custom_call.1} parent=1 // pred_fallthru
      _
    // Predicated region
    $region6: #{tpu_custom_call.1} parent=1 // pred_check
      _
    $region7: #{tpu_custom_call.1} parent=1 // pred_check_branch
      %27 = sbr.rel (0) target = $region9
    $region8: #{tpu_custom_call.1} parent=1 // pred_region
      _
    $region9: #{tpu_custom_call.1} parent=1 // pred_fallthru
      _
    // Predicated region
    $region10: #{tpu_custom_call.1} parent=1 // pred_check
      _
    $region11: #{tpu_custom_call.1} parent=1 // pred_check_branch
      %29 = sbr.rel (0) target = $region13
    $region12: #{tpu_custom_call.1} parent=1 // pred_region
      %s31 = ssub.s32 128, 128
      %32 = vsyncadd [#allocation6], %s31
      %s34 = sshll.u32 [#allocation5], 4
      %s35 = int_to_ptr.vmem [resolvable:$true] %s34
      %37 = dma.hbm_to_vmem [thread:$0]  %s2, 128, %s35, [#allocation6]
    $region13: #{tpu_custom_call.1} parent=1 // pred_fallthru
      _
    // Predicated region
    $region14: #{tpu_custom_call.1} parent=1 // pred_check
      _
    $region15: #{tpu_custom_call.1} parent=1 // pred_check_branch
      %39 = sbr.rel (0) target = $region17
    $region16: #{tpu_custom_call.1} parent=1 // pred_region
      _
    $region17: #{tpu_custom_call.1} parent=1 // pred_fallthru
      _
    // Predicated region
    $region18: #{tpu_custom_call.1} parent=1 // pred_check
      _
    $region19: #{tpu_custom_call.1} parent=1 // pred_check_branch
      %41 = sbr.rel (0) target = $region21
    $region20: #{tpu_custom_call.1} parent=1 // pred_region
      %s43 = ssub.s32 128, 128
      %44 = vsyncadd [#allocation6], %s43
      %s46 = sshll.u32 [#allocation7], 4
      %s47 = int_to_ptr.vmem [resolvable:$true] %s46
      %49 = dma.hbm_to_vmem [thread:$0]  %s4, 128, %s47, [#allocation6]
    $region21: #{tpu_custom_call.1} parent=1 // pred_fallthru
      _
    // Predicated region
    $region22: #{tpu_custom_call.1} parent=1 // pred_check
      _
    $region23: #{tpu_custom_call.1} parent=1 // pred_check_branch
      %51 = sbr.rel (0) target = $region25
    $region24: #{tpu_custom_call.1} parent=1 // pred_region
      %52 = dma.done [#allocation3], 32
    $region25: #{tpu_custom_call.1} parent=1 // pred_fallthru
      _
    // Predicated region
    $region26: #{tpu_custom_call.1} parent=1 // pred_check
      _
    $region27: #{tpu_custom_call.1} parent=1 // pred_check_branch
      %54 = sbr.rel (0) target = $region29
    $region28: #{tpu_custom_call.1} parent=1 // pred_region
      %55 = dma.done [#allocation6], 128
    $region29: #{tpu_custom_call.1} parent=1 // pred_fallthru
      _
    // Predicated region
    $region30: #{tpu_custom_call.1} parent=1 // pred_check
      _
    $region31: #{tpu_custom_call.1} parent=1 // pred_check_branch
      %57 = sbr.rel (0) target = $region33
    $region32: #{tpu_custom_call.1} parent=1 // pred_region
      %58 = dma.done [#allocation6], 128
    $region33: #{tpu_custom_call.1} parent=1 // pred_fallthru
      _
    %v59 = vld [vmem:[%s1] sm:$0x3]
    %v61 = vlaneseq
    %v62 = vshrl.u32 %v61, 7
    %v63 = vsub.s32 0, %v62
    %v64 = vrot.slane %v59, %v63
    %v65 = vlaneseq
    %v66 = vshrl.u32 %v65, 7
    %v67 = vsub.s32 1, %v66
    %v68 = vrot.slane %v59, %v67
    %v71 = vld [vmem:[#allocation2] sm:$0x3]
    %v73 = vlaneseq
    %v74 = vshrl.u32 %v73, 7
    %v75 = vsub.s32 0, %v74
    %v76 = vrot.slane %v71, %v75
    %v77 = vlaneseq
    %v78 = vshrl.u32 %v77, 7
    %v79 = vsub.s32 1, %v78
    %v80 = vrot.slane %v71, %v79
    %v83 = vld [vmem:[#allocation5] sm:$0xff]
    %85 = vset.pattern.permute.xlu0 7
    %86 = vperm.xlu0 %85, %v83
    %v87 = vpop.permute.xlu0 %86
    %vm89 = vcmp.gt.f32.partialorder %v87, %v64
    %vm90 = vcmp.gt.f32.partialorder %v87, %v68
    %91 = vset.pattern.permute.xlu0 0
    %92 = vperm.xlu0 %91, %v83
    %v93 = vpop.permute.xlu0 %92
    %vm95 = vcmp.gt.f32.partialorder %v93, %v64
    %vm96 = vcmp.gt.f32.partialorder %v93, %v68
    %v97 = vld [vmem:[%s3] sm:$0xff]
    %99 = vset.pattern.permute.xlu0 0
    %100 = vperm.xlu0 %99, %v97
    %v101 = vpop.permute.xlu0 %100
    %v103 = vmul.f32 %v101, %v64
    %v104 = vmul.f32 %v101, %v68
    %v105 = vld [vmem:[#allocation7] sm:$0xff]
    %107 = vset.pattern.permute.xlu0 0
    %108 = vperm.xlu0 %107, %v105
    %v109 = vpop.permute.xlu0 %108
    %v111 = vadd.f32 %v103, %v109
    %v112 = vadd.f32 %v104, %v109
    %vm113 = vmxor %vm95, %vm89
    %vm114 = vmxor %vm96, %vm90
    %vm115 = vcmp.lt.f32.partialorder %v76, %v111
    %vm116 = vcmp.lt.f32.partialorder %v80, %v112
    %vm117 = vmand %vm113, %vm115
    %vm118 = vmand %vm114, %vm116
    %119 = vset.pattern.permute.xlu0 1
    %120 = vperm.xlu0 %119, %v83
    %v121 = vpop.permute.xlu0 %120
    %vm123 = vcmp.gt.f32.partialorder %v121, %v64
    %vm124 = vcmp.gt.f32.partialorder %v121, %v68
    %125 = vset.pattern.permute.xlu0 1
    %126 = vperm.xlu0 %125, %v97
    %v127 = vpop.permute.xlu0 %126
    %v129 = vmul.f32 %v127, %v64
    %v130 = vmul.f32 %v127, %v68
    %131 = vset.pattern.permute.xlu0 1
    %132 = vperm.xlu0 %131, %v105
    %v133 = vpop.permute.xlu0 %132
    %v135 = vadd.f32 %v129, %v133
    %v136 = vadd.f32 %v130, %v133
    %vm137 = vmxor %vm123, %vm95
    %vm138 = vmxor %vm124, %vm96
    %vm139 = vcmp.lt.f32.partialorder %v76, %v135
    %vm140 = vcmp.lt.f32.partialorder %v80, %v136
    %vm141 = vmand %vm137, %vm139
    %vm142 = vmand %vm138, %vm140
    %vm143 = vmxor %vm117, %vm141
    %vm144 = vmxor %vm118, %vm142
    %145 = vset.pattern.permute.xlu0 2
    %146 = vperm.xlu0 %145, %v83
    %v147 = vpop.permute.xlu0 %146
    %vm149 = vcmp.gt.f32.partialorder %v147, %v64
    %vm150 = vcmp.gt.f32.partialorder %v147, %v68
    %151 = vset.pattern.permute.xlu0 2
    %152 = vperm.xlu0 %151, %v97
    %v153 = vpop.permute.xlu0 %152
    %v155 = vmul.f32 %v153, %v64
    %v156 = vmul.f32 %v153, %v68
    %157 = vset.pattern.permute.xlu0 2
    %158 = vperm.xlu0 %157, %v105
    %v159 = vpop.permute.xlu0 %158
    %v161 = vadd.f32 %v155, %v159
    %v162 = vadd.f32 %v156, %v159
    %vm163 = vmxor %vm149, %vm123
    %vm164 = vmxor %vm150, %vm124
    %vm165 = vcmp.lt.f32.partialorder %v76, %v161
    %vm166 = vcmp.lt.f32.partialorder %v80, %v162
    %vm167 = vmand %vm163, %vm165
    %vm168 = vmand %vm164, %vm166
    %vm169 = vmxor %vm143, %vm167
    %vm170 = vmxor %vm144, %vm168
    %171 = vset.pattern.permute.xlu0 3
    %172 = vperm.xlu0 %171, %v83
    %v173 = vpop.permute.xlu0 %172
    %vm175 = vcmp.gt.f32.partialorder %v173, %v64
    %vm176 = vcmp.gt.f32.partialorder %v173, %v68
    %177 = vset.pattern.permute.xlu0 3
    %178 = vperm.xlu0 %177, %v97
    %v179 = vpop.permute.xlu0 %178
    %v181 = vmul.f32 %v179, %v64
    %v182 = vmul.f32 %v179, %v68
    %183 = vset.pattern.permute.xlu0 3
    %184 = vperm.xlu0 %183, %v105
    %v185 = vpop.permute.xlu0 %184
    %v187 = vadd.f32 %v181, %v185
    %v188 = vadd.f32 %v182, %v185
    %vm189 = vmxor %vm175, %vm149
    %vm190 = vmxor %vm176, %vm150
    %vm191 = vcmp.lt.f32.partialorder %v76, %v187
    %vm192 = vcmp.lt.f32.partialorder %v80, %v188
    %vm193 = vmand %vm189, %vm191
    %vm194 = vmand %vm190, %vm192
    %vm195 = vmxor %vm169, %vm193
    %vm196 = vmxor %vm170, %vm194
    %197 = vset.pattern.permute.xlu0 4
    %198 = vperm.xlu0 %197, %v83
    %v199 = vpop.permute.xlu0 %198
    %vm201 = vcmp.gt.f32.partialorder %v199, %v64
    %vm202 = vcmp.gt.f32.partialorder %v199, %v68
    %203 = vset.pattern.permute.xlu0 4
    %204 = vperm.xlu0 %203, %v97
    %v205 = vpop.permute.xlu0 %204
    %v207 = vmul.f32 %v205, %v64
    %v208 = vmul.f32 %v205, %v68
    %209 = vset.pattern.permute.xlu0 4
    %210 = vperm.xlu0 %209, %v105
    %v211 = vpop.permute.xlu0 %210
    %v213 = vadd.f32 %v207, %v211
    %v214 = vadd.f32 %v208, %v211
    %vm215 = vmxor %vm201, %vm175
    %vm216 = vmxor %vm202, %vm176
    %vm217 = vcmp.lt.f32.partialorder %v76, %v213
    %vm218 = vcmp.lt.f32.partialorder %v80, %v214
    %vm219 = vmand %vm215, %vm217
    %vm220 = vmand %vm216, %vm218
    %vm221 = vmxor %vm195, %vm219
    %vm222 = vmxor %vm196, %vm220
    %223 = vset.pattern.permute.xlu0 5
    %224 = vperm.xlu0 %223, %v83
    %v225 = vpop.permute.xlu0 %224
    %vm227 = vcmp.gt.f32.partialorder %v225, %v64
    %vm228 = vcmp.gt.f32.partialorder %v225, %v68
    %229 = vset.pattern.permute.xlu0 5
    %230 = vperm.xlu0 %229, %v97
    %v231 = vpop.permute.xlu0 %230
    %v233 = vmul.f32 %v231, %v64
    %v234 = vmul.f32 %v231, %v68
    %235 = vset.pattern.permute.xlu0 5
    %236 = vperm.xlu0 %235, %v105
    %v237 = vpop.permute.xlu0 %236
    %v239 = vadd.f32 %v233, %v237
    %v240 = vadd.f32 %v234, %v237
    %vm241 = vmxor %vm227, %vm201
    %vm242 = vmxor %vm228, %vm202
    %vm243 = vcmp.lt.f32.partialorder %v76, %v239
    %vm244 = vcmp.lt.f32.partialorder %v80, %v240
    %vm245 = vmand %vm241, %vm243
    %vm246 = vmand %vm242, %vm244
    %vm247 = vmxor %vm221, %vm245
    %vm248 = vmxor %vm222, %vm246
    %249 = vset.pattern.permute.xlu0 6
    %250 = vperm.xlu0 %249, %v83
    %v251 = vpop.permute.xlu0 %250
    %vm253 = vcmp.gt.f32.partialorder %v251, %v64
    %vm254 = vcmp.gt.f32.partialorder %v251, %v68
    %255 = vset.pattern.permute.xlu0 6
    %256 = vperm.xlu0 %255, %v97
    %v257 = vpop.permute.xlu0 %256
    %v259 = vmul.f32 %v257, %v64
    %v260 = vmul.f32 %v257, %v68
    %261 = vset.pattern.permute.xlu0 6
    %262 = vperm.xlu0 %261, %v105
    %v263 = vpop.permute.xlu0 %262
    %v265 = vadd.f32 %v259, %v263
    %v266 = vadd.f32 %v260, %v263
    %vm267 = vmxor %vm253, %vm227
    %vm268 = vmxor %vm254, %vm228
    %vm269 = vcmp.lt.f32.partialorder %v76, %v265
    %vm270 = vcmp.lt.f32.partialorder %v80, %v266
    %vm271 = vmand %vm267, %vm269
    %vm272 = vmand %vm268, %vm270
    %vm273 = vmxor %vm247, %vm271
    %vm274 = vmxor %vm248, %vm272
    %275 = vset.pattern.permute.xlu0 7
    %276 = vperm.xlu0 %275, %v97
    %v277 = vpop.permute.xlu0 %276
    %v279 = vmul.f32 %v277, %v64
    %v280 = vmul.f32 %v277, %v68
    %281 = vset.pattern.permute.xlu0 7
    %282 = vperm.xlu0 %281, %v105
    %v283 = vpop.permute.xlu0 %282
    %v285 = vadd.f32 %v279, %v283
    %v286 = vadd.f32 %v280, %v283
    %vm287 = vmxor %vm89, %vm253
    %vm288 = vmxor %vm90, %vm254
    %vm289 = vcmp.lt.f32.partialorder %v76, %v285
    %vm290 = vcmp.lt.f32.partialorder %v80, %v286
    %vm291 = vmand %vm287, %vm289
    %vm292 = vmand %vm288, %vm290
    %vm293 = vmxor %vm273, %vm291
    %vm294 = vmxor %vm274, %vm292
    %v295 = vsel %vm293, 1, 0
    %v296 = vsel %vm294, 1, 0
    %v297 = vcvt.s32.f32 %v295
    %v298 = vcvt.s32.f32 %v296
    %299 = vst [vmem:[#allocation8] sm:$0xff] %v297
    %300 = vst [vmem:[#allocation8 + $0x8] sm:$0xff] %v298
    %v301 = vrot.slane %v297, 4
    %v302 = vmax.f32 %v297, %v301
    %v303 = vrot.slane %v302, 2
    %v304 = vmax.f32 %v302, %v303
    %v305 = vrot.slane %v304, 1
    %v306 = vmax.f32 %v304, %v305
    %v307 = vrot.slane %v298, 4
    %v308 = vmax.f32 %v298, %v307
    %v309 = vrot.slane %v308, 2
    %v310 = vmax.f32 %v308, %v309
    %v311 = vrot.slane %v310, 1
    %v312 = vmax.f32 %v310, %v311
    %v315 = vcombine.low %v306, %v312
    %v317 = vunpack.c.l.s4 1966171168
    %v318 = vunpack.c.0.s8 %v317
    %v319 = vlaneseq
    %v320 = vshrl.u32 %v319, 7
    %v321 = vsub.s32 %v318, %v320
    %v322 = vrot.slane %v315, %v321
    %v324 = vunpack.c.l.s4 1966171168
    %v325 = vunpack.c.0.s8 %v324
    %v326 = vlaneseq
    %v327 = vshrl.u32 %v326, 7
    %v328 = vsub.s32 %v325, %v327
    %v329 = vrot.slane %v322, %v328
    %v331 = vlaneseq
    %vm332 = vcmp.ge.s32.totalorder %v331, 0
    %vm333 = vcmp.lt.s32.totalorder %v331, 256
    %vm334 = vmand %vm332, %vm333
    %335 = vst.msk [vmem:[#allocation9] sm:$0x3] %vm334, %v329
    // Predicated region
    $region34: #{tpu_custom_call.1} parent=1 // pred_check
      _
    $region35: #{tpu_custom_call.1} parent=1 // pred_check_branch
      %337 = sbr.rel (0) target = $region37
    $region36: #{tpu_custom_call.1} parent=1 // pred_region
      %s339 = ssub.s32 256, 256
      %340 = vsyncadd [#allocation4], %s339
      %s342 = sshll.u32 [#allocation8], 4
      %s343 = int_to_ptr.vmem [resolvable:$true] %s342
      %345 = dma.vmem_to_hbm [thread:$0]  %s343, 256, %s5, [#allocation4]
    $region37: #{tpu_custom_call.1} parent=1 // pred_fallthru
      _
    // Predicated region
    $region38: #{tpu_custom_call.1} parent=1 // pred_check
      _
    $region39: #{tpu_custom_call.1} parent=1 // pred_check_branch
      %347 = sbr.rel (0) target = $region41
    $region40: #{tpu_custom_call.1} parent=1 // pred_region
      %s349 = ssub.s32 32, 32
      %350 = vsyncadd [#allocation10], %s349
      %s352 = sshll.u32 [#allocation9], 4
      %s353 = int_to_ptr.vmem [resolvable:$true] %s352
      %355 = dma.vmem_to_hbm [thread:$0]  %s353, 32, %s6, [#allocation10]
    $region41: #{tpu_custom_call.1} parent=1 // pred_fallthru
      _
    // Predicated region
    $region42: #{tpu_custom_call.1} parent=1 // pred_check
      _
    $region43: #{tpu_custom_call.1} parent=1 // pred_check_branch
      %357 = sbr.rel (0) target = $region45
    $region44: #{tpu_custom_call.1} parent=1 // pred_region
      %358 = dma.done [#allocation4], 256
    $region45: #{tpu_custom_call.1} parent=1 // pred_fallthru
      _
    // Predicated region
    $region46: #{tpu_custom_call.1} parent=1 // pred_check
      _
    $region47: #{tpu_custom_call.1} parent=1 // pred_check_branch
      %360 = sbr.rel (0) target = $region49
    $region48: #{tpu_custom_call.1} parent=1 // pred_region
      %361 = dma.done [#allocation10], 32
    $region49: #{tpu_custom_call.1} parent=1 // pred_fallthru
      _
    %362 = vsyncpa [#allocation3], 1
    %363 = vsyncpa [#allocation6], 1
    %364 = vsyncpa [#allocation4], 1
    %365 = vsyncpa [#allocation10], 1

</llo_original>
